<compile_context>
chip_gen: v5e
topology: v5e:2x2
jax: 0.10.0
libtpu: 0.0.40
codegen_flags: <defaults>
</compile_context>

<pallas_src>
import functools
import math

import jax
import jax.numpy as jnp
from jax import lax
from jax.experimental import pallas as pl
from jax.experimental.pallas import tpu as pltpu


# ----------------------------------------------------------------------------
# pass 1: fused K/V projection (streaming GEMM over channel-major x)
# ----------------------------------------------------------------------------
def _kv_proj_kernel(x_ref, wkv_ref, bkv_ref, k_ref, v_ref):
    c = k_ref.shape[-1]
    x_ct = x_ref[0].astype(wkv_ref.dtype)                     # (C, TS) MXU operand
    # kv = x^T @ Wkv  via a transposed-LHS contraction (no explicit relayout).
    kv = lax.dot_general(x_ct, wkv_ref[...], (((0,), (0,)), ((), ())),
                         preferred_element_type=jnp.float32) + bkv_ref[...]  # (TS,2C)
    k_ref[0] = kv[:, :c].astype(k_ref.dtype)
    v_ref[0] = kv[:, c:].astype(v_ref.dtype)


# ----------------------------------------------------------------------------
# pass 2: q-projection + flash attention + out_proj + residual
# ----------------------------------------------------------------------------
def _flash_attn_kernel(x_ref, k_ref, v_ref, wq_ref, bq_ref, wo_ref, bo_ref,
                       o_ref, q_sc, m_sc, l_sc, acc_sc, *, scale, approx_recip):
    ki = pl.program_id(2)

    @pl.when(ki == 0)
    def _init():
        # Fused q projection: x tile stays resident across the whole key loop.
        x_ct = x_ref[0].astype(wq_ref.dtype)                  # (C, TQ)
        q = lax.dot_general(x_ct, wq_ref[...], (((0,), (0,)), ((), ())),
                            preferred_element_type=jnp.float32)  # (TQ, C) f32
        q = (q + bq_ref[...]) * scale          # fold 1/sqrt(d_head) onto q once
        q_sc[...] = q.astype(q_sc.dtype)
        m_sc[...] = jnp.full_like(m_sc, -jnp.inf)
        l_sc[...] = jnp.zeros_like(l_sc)
        acc_sc[...] = jnp.zeros_like(acc_sc)

    q = q_sc[...]                                             # (TQ, C), scaled
    k = k_ref[0]                                              # (TK, C)
    v = v_ref[0]                                              # (TK, C)

    # scores = q @ k^T without materializing a transposed copy of k.
    s = lax.dot_general(q, k, (((1,), (1,)), ((), ())),
                        preferred_element_type=jnp.float32)   # (TQ, TK) f32

    m_prev = m_sc[...]
    m_new = jnp.maximum(m_prev, jnp.max(s, axis=-1, keepdims=True))
    alpha = jnp.exp(m_prev - m_new)                           # (TQ, 1) f32
    p = jnp.exp(s - m_new)                                    # (TQ, TK) f32
    l_sc[...] = alpha * l_sc[...] + jnp.sum(p, axis=-1, keepdims=True)
    acc_sc[...] = alpha * acc_sc[...] + jnp.dot(
        p.astype(v.dtype), v, preferred_element_type=jnp.float32)
    m_sc[...] = m_new

    @pl.when(ki == pl.num_programs(2) - 1)
    def _finalize():
        attn = acc_sc[...] * pl.reciprocal(l_sc[...], approx=approx_recip)  # (TQ,C)
        # out^T = W_out @ attn^T, done as an NT contraction with W_out kept in
        # its native (out, in) layout -> channel-major (C, TQ) result, so the
        # store is lane-dense and no XLU transpose is needed.
        out_ct = lax.dot_general(wo_ref[...], attn.astype(wo_ref.dtype),
                                 (((1,), (1,)), ((), ())),
                                 preferred_element_type=jnp.float32)        # (C,TQ)
        out_ct = out_ct + bo_ref[...]                                       # +(C,1)
        # Residual add from the same resident x tile, in f32, native x dtype out.
        o_ref[0] = (out_ct + x_ref[0].astype(jnp.float32)).astype(o_ref.dtype)


# ----------------------------------------------------------------------------
# driver
# ----------------------------------------------------------------------------
def _pick_tile(s, target):
    """Largest divisor of s <= target, preferring multiples of 256, then 128, then 8."""
    if s <= target:
        return s
    for align in (256, 128, 8):
        t = (target // align) * align
        while t >= align:
            if s % t == 0:
                return t
            t -= align
    # TODO(synk): pad S to a lane-aligned tile (grid via pl.cdiv) and mask keys
    # with -inf instead of falling back to the full sequence here.
    return s


def vae_attention_block(x_nchw, w_in, b_in, w_out, b_out, *,
                        compute_dtype=jnp.bfloat16,
                        tq=1024, tk=512, ts=1024,
                        vmem_limit_bytes=48 * 1024 * 1024):
    """VAE_AttentionBlock.forward.

    x_nchw : (N, C, H, W)
    w_in   : (3C, C)  PyTorch in_proj Linear weight;  b_in  : (3C,)
    w_out  : (C, C)   PyTorch out_proj Linear weight; b_out : (C,)
    """
    n, c, h, w = x_nchw.shape
    s = h * w

    # Free reshape (contiguous merge of H,W) — no HBM transpose in the driver;
    # both kernels consume / produce the channel-major (N, C, S) layout directly.
    x_ncs = x_nchw.reshape(n, c, s)

    w_in = jnp.asarray(w_in)
    b_in = jnp.asarray(b_in)
    # in_proj weight rows are [q | k | v] blocks (each (C, C) in (out,in) layout).
    wq = jnp.asarray(w_in[:c].T, dtype=compute_dtype)             # (C, C)  (in,out)
    wkv = jnp.asarray(w_in[c:].T, dtype=compute_dtype)            # (C, 2C) (in,out)
    bq = jnp.asarray(b_in[:c], dtype=jnp.float32).reshape(1, c)
    bkv = jnp.asarray(b_in[c:], dtype=jnp.float32).reshape(1, 2 * c)
    wo = jnp.asarray(w_out, dtype=compute_dtype)                  # (C, C)  (out,in)
    bo = jnp.asarray(b_out, dtype=jnp.float32).reshape(c, 1)

    ts = _pick_tile(s, ts)
    tq = _pick_tile(s, tq)
    tk = _pick_tile(s, tk)
    scale = 1.0 / math.sqrt(c)        # single head -> d_head = C
    approx_recip = jnp.dtype(compute_dtype) != jnp.dtype(jnp.float32)

    # ---- pass 1: fused K/V projection --------------------------------------
    k, v = pl.pallas_call(
        _kv_proj_kernel,
        out_shape=tuple(jax.ShapeDtypeStruct((n, s, c), compute_dtype)
                        for _ in range(2)),
        grid=(n, s // ts),
        in_specs=[
            pl.BlockSpec((1, c, ts), lambda b, i: (b, 0, i)),     # x tile (C, TS)
            pl.BlockSpec((c, 2 * c), lambda b, i: (0, 0)),        # Wkv (resident)
            pl.BlockSpec((1, 2 * c), lambda b, i: (0, 0)),        # bkv (resident)
        ],
        out_specs=tuple(pl.BlockSpec((1, ts, c), lambda b, i: (b, i, 0))
                        for _ in range(2)),
        compiler_params=pltpu.CompilerParams(
            dimension_semantics=("parallel", "parallel"),
            vmem_limit_bytes=vmem_limit_bytes),
    )(x_ncs, wkv, bkv)

    # ---- pass 2: q-proj + flash attention + out_proj + residual ------------
    out_ncs = pl.pallas_call(
        functools.partial(_flash_attn_kernel, scale=scale,
                          approx_recip=approx_recip),
        out_shape=jax.ShapeDtypeStruct((n, c, s), x_nchw.dtype),
        grid=(n, s // tq, s // tk),
        in_specs=[
            pl.BlockSpec((1, c, tq), lambda b, qi, ki: (b, 0, qi)),  # x (q-proj + residual)
            pl.BlockSpec((1, tk, c), lambda b, qi, ki: (b, ki, 0)),  # k  (per k-tile)
            pl.BlockSpec((1, tk, c), lambda b, qi, ki: (b, ki, 0)),  # v  (per k-tile)
            pl.BlockSpec((c, c), lambda b, qi, ki: (0, 0)),          # Wq   (resident)
            pl.BlockSpec((1, c), lambda b, qi, ki: (0, 0)),          # bq   (resident)
            pl.BlockSpec((c, c), lambda b, qi, ki: (0, 0)),          # Wout (resident)
            pl.BlockSpec((c, 1), lambda b, qi, ki: (0, 0)),          # bout (resident)
        ],
        out_specs=pl.BlockSpec((1, c, tq), lambda b, qi, ki: (b, 0, qi)),
        scratch_shapes=[
            pltpu.VMEM((tq, c), compute_dtype),  # projected (scaled) q
            pltpu.VMEM((tq, 1), jnp.float32),    # running row max
            pltpu.VMEM((tq, 1), jnp.float32),    # running denominator
            pltpu.VMEM((tq, c), jnp.float32),    # output accumulator
        ],
        compiler_params=pltpu.CompilerParams(
            dimension_semantics=("parallel", "parallel", "arbitrary"),
            vmem_limit_bytes=vmem_limit_bytes),
    )(x_ncs, k, v, wq, bq, wo, bo)

    # Free reshape back to NCHW.
    return out_ncs.reshape(n, c, h, w)


# ----------------------------------------------------------------------------
# pure-JAX reference (exact PyTorch forward semantics)
# ----------------------------------------------------------------------------
def reference_forward(x_nchw, w_in, b_in, w_out, b_out):
    n, c, h, w = x_nchw.shape
    s = h * w
    x = jnp.transpose(x_nchw.reshape(n, c, s), (0, 2, 1)).astype(jnp.float32)
    qkv = x @ w_in.T + b_in                                   # in_proj + chunk(3)
    q, k, v = qkv[..., :c], qkv[..., c:2 * c], qkv[..., 2 * c:]
    scores = jnp.einsum("nsc,ntc->nst", q, k) / math.sqrt(c)  # 1 head -> d_head=C
    p = jax.nn.softmax(scores, axis=-1)
    attn = jnp.einsum("nst,ntc->nsc", p, v)
    out = attn @ w_out.T + b_out                              # out_proj
    out = out + x                                             # residual
    return jnp.transpose(out, (0, 2, 1)).reshape(n, c, h, w).astype(x_nchw.dtype)


if __name__ == "__main__":
    # channels % 32 == 0 required by GroupNorm(32, channels) in __init__.
    N, C, H, W = 2, 64, 16, 16

    key = jax.random.PRNGKey(0)
    kx, kwi, kbi, kwo, kbo = jax.random.split(key, 5)

    x = jax.random.normal(kx, (N, C, H, W), dtype=jnp.float32)
    w_in = 0.02 * jax.random.normal(kwi, (3 * C, C), dtype=jnp.float32)
    b_in = 0.02 * jax.random.normal(kbi, (3 * C,), dtype=jnp.float32)
    w_out = 0.02 * jax.random.normal(kwo, (C, C), dtype=jnp.float32)
    b_out = 0.02 * jax.random.normal(kbo, (C,), dtype=jnp.float32)

    ref = reference_forward(x, w_in, b_in, w_out, b_out)

    # f32 MXU operands (exact reciprocal on this path): tight tolerance.
    out_f32 = vae_attention_block(x, w_in, b_in, w_out, b_out,
                                  compute_dtype=jnp.float32)
    out_f32 = jax.block_until_ready(out_f32)
    assert out_f32.shape == x.shape and out_f32.dtype == x.dtype
    assert jnp.allclose(out_f32, ref, atol=2e-3, rtol=2e-3), "f32 mismatch"

    # bf16 MXU operands / f32 accumulation (default production path).
    out_bf16 = vae_attention_block(x, w_in, b_in, w_out, b_out,
                                   compute_dtype=jnp.bfloat16)
    out_bf16 = jax.block_until_ready(out_bf16)
    assert out_bf16.shape == x.shape and out_bf16.dtype == x.dtype
    assert jnp.allclose(out_bf16, ref, atol=3e-2, rtol=3e-2), "bf16 mismatch"

    print("KERNEL_OK")
</pallas_src>

<mosaic_0001>
module attributes {stable_mosaic.version = 11 : i64} {
  func.func @_kv_proj_kernel(%arg0: i32, %arg1: i32, %arg2: memref<1x64x256xf32, #tpu.memory_space<vmem>>, %arg3: memref<64x128xf32, #tpu.memory_space<vmem>>, %arg4: memref<1x128xf32, #tpu.memory_space<vmem>>, %arg5: memref<1x256x64xf32, #tpu.memory_space<vmem>>, %arg6: memref<1x256x64xf32, #tpu.memory_space<vmem>>) attributes {dimension_semantics = [#tpu.dimension_semantics<parallel>, #tpu.dimension_semantics<parallel>], iteration_bounds = array<i64: 2, 1>, scalar_prefetch = 0 : i64, scratch_operands = 0 : i64, tpu.core_type = #tpu.core_type<tc>, window_params = [{transform_indices = @transform_0, window_bounds = array<i64: 1, 64, 256>}, {pipeline_mode = #tpu.pipeline_mode<synchronous>, transform_indices = @transform_1, window_bounds = array<i64: 64, 128>}, {pipeline_mode = #tpu.pipeline_mode<synchronous>, transform_indices = @transform_2, window_bounds = array<i64: 1, 128>}, {transform_indices = @transform_3, window_bounds = array<i64: 1, 256, 64>}, {transform_indices = @transform_4, window_bounds = array<i64: 1, 256, 64>}]} {
    %c0 = arith.constant 0 : index
    %c0_0 = arith.constant 0 : index
    %c0_1 = arith.constant 0 : index
    %0 = vector.load %arg2[%c0, %c0_0, %c0_1] : memref<1x64x256xf32, #tpu.memory_space<vmem>>, vector<1x64x256xf32>
    %1 = vector.shape_cast %0 : vector<1x64x256xf32> to vector<64x256xf32>
    %c0_2 = arith.constant 0 : index
    %c0_3 = arith.constant 0 : index
    %2 = vector.load %arg3[%c0_2, %c0_3] : memref<64x128xf32, #tpu.memory_space<vmem>>, vector<64x128xf32>
    %cst = arith.constant dense<0.000000e+00> : vector<256x128xf32>
    %3 = tpu.matmul %1, %2, %cst {dimension_numbers = #tpu.dot_dimension_numbers<[0], [0], [1], [1], [0, 1, 1, 1], [], []>} : vector<64x256xf32>, vector<64x128xf32>, vector<256x128xf32> -> vector<256x128xf32>
    %c0_4 = arith.constant 0 : index
    %c0_5 = arith.constant 0 : index
    %4 = vector.load %arg4[%c0_4, %c0_5] : memref<1x128xf32, #tpu.memory_space<vmem>>, vector<1x128xf32>
    %5 = vector.broadcast %4 : vector<1x128xf32> to vector<256x128xf32>
    %6 = arith.addf %3, %5 : vector<256x128xf32>
    %7 = vector.extract_strided_slice %6 {offsets = [0, 0], sizes = [256, 64], strides = [1, 1]} : vector<256x128xf32> to vector<256x64xf32>
    %c0_6 = arith.constant 0 : index
    %c0_7 = arith.constant 0 : index
    %c0_8 = arith.constant 0 : index
    %8 = vector.load %arg5[%c0_6, %c0_7, %c0_8] : memref<1x256x64xf32, #tpu.memory_space<vmem>>, vector<1x256x64xf32>
    %9 = vector.shape_cast %8 : vector<1x256x64xf32> to vector<256x64xf32>
    %10 = vector.shape_cast %7 : vector<256x64xf32> to vector<1x256x64xf32>
    tpu.vector_store %arg5[%c0_6, %c0_7, %c0_8], %10 {strides = array<i32>} : memref<1x256x64xf32, #tpu.memory_space<vmem>>, vector<1x256x64xf32>,
    %11 = vector.extract_strided_slice %6 {offsets = [0, 64], sizes = [256, 64], strides = [1, 1]} : vector<256x128xf32> to vector<256x64xf32>
    %c0_9 = arith.constant 0 : index
    %c0_10 = arith.constant 0 : index
    %c0_11 = arith.constant 0 : index
    %12 = vector.load %arg6[%c0_9, %c0_10, %c0_11] : memref<1x256x64xf32, #tpu.memory_space<vmem>>, vector<1x256x64xf32>
    %13 = vector.shape_cast %12 : vector<1x256x64xf32> to vector<256x64xf32>
    %14 = vector.shape_cast %11 : vector<256x64xf32> to vector<1x256x64xf32>
    tpu.vector_store %arg6[%c0_9, %c0_10, %c0_11], %14 {strides = array<i32>} : memref<1x256x64xf32, #tpu.memory_space<vmem>>, vector<1x256x64xf32>,
    return
  }
  func.func @transform_0(%arg0: i32, %arg1: i32) -> (i32, i32, i32) {
    %c0_i32 = arith.constant 0 : i32
    %c0_i32_0 = arith.constant 0 : i32
    return %arg0, %c0_i32, %arg1 : i32, i32, i32
  }
  func.func @transform_1(%arg0: i32, %arg1: i32) -> (i32, i32) {
    %c0_i32 = arith.constant 0 : i32
    %c0_i32_0 = arith.constant 0 : i32
    %c0_i32_1 = arith.constant 0 : i32
    return %c0_i32, %c0_i32_0 : i32, i32
  }
  func.func @transform_2(%arg0: i32, %arg1: i32) -> (i32, i32) {
    %c0_i32 = arith.constant 0 : i32
    %c0_i32_0 = arith.constant 0 : i32
    %c0_i32_1 = arith.constant 0 : i32
    return %c0_i32, %c0_i32_0 : i32, i32
  }
  func.func @transform_3(%arg0: i32, %arg1: i32) -> (i32, i32, i32) {
    %c0_i32 = arith.constant 0 : i32
    %c0_i32_0 = arith.constant 0 : i32
    return %arg0, %arg1, %c0_i32 : i32, i32, i32
  }
  func.func @transform_4(%arg0: i32, %arg1: i32) -> (i32, i32, i32) {
    %c0_i32 = arith.constant 0 : i32
    %c0_i32_0 = arith.constant 0 : i32
    return %arg0, %arg1, %c0_i32 : i32, i32, i32
  }
}

</mosaic_0001>

<llo_original>
// kernel: tpu_custom_call.1
$region0: #{tpu_custom_call.1}
  #allocation0 [shape = 'u32[]', space=smem, size = 0x4, offset = 0x4, fixed_abs, tag = 'smem constant byte address 0x4 - core index']
  #allocation1 [shape = 'u32[72,128]{1,0:T(1,128)}', space=vmem, size = 0x9000, scoped, tag = 'internal scratch']
  %s0 = inlined_call_operand.hbm [shape: f32[2,64,256], index: 0, kind: input, shape index: {}]
  %s1 = inlined_call_operand.hbm [shape: f32[64,128], index: 1, kind: input, shape index: {}]
  %s2 = inlined_call_operand.vmem [shape: f32[1,128], index: 2, kind: input, shape index: {}]
  %s3 = inlined_call_operand.vmem [shape: f32[2,256,64], index: 3, kind: output, shape index: {0}]
  %s4 = inlined_call_operand.vmem [shape: f32[2,256,64], index: 4, kind: output, shape index: {1}]
  %5 = xla_tuple %s3, %s4
  %s6 = sld [smem:[#allocation0]]
  $region61: #{tpu_custom_call.1} parent=0
    _
  %s8 = ssub.s32 1, %s6
  %s9 = scalar_select 0, %s8, %s6
  $region1: #{tpu_custom_call.1} parent=0
    #allocation2 [shape = 'u8[131072]{0}', space=vmem, size = 0x20000, scoped, tag = 'input window, operand 0']
    #allocation3 [shape = 's32[2]{0}', space=sflag, size = 0x8, scoped, tag = 'scoped memory for tpu_custom_call.1']
    #allocation4 [shape = 'u8[32768]{0}', space=vmem, size = 0x8000, scoped, tag = 'input window, operand 1, single buffered']
    #allocation5 [shape = 's32[1]{0}', space=sflag, size = 0x4, scoped, tag = 'scoped memory for tpu_custom_call.1']
    %10 = vsyncpa [#allocation3], 0
    %s11 = scalar_lea.sflag [#allocation3], 1
    %12 = vsyncpa %s11, 0
    %13 = vsyncpa [#allocation5], 0
    loop: start=0, step=1, limit=4
    $region2: #{tpu_custom_call.1} parent=1 // loop_pre_header
      _
    $region3: #{tpu_custom_call.1} parent=1 // loop_header
      %s15 = sphi 0, %s19
      %p16 = scmp.ge.s32.totalorder %s15, 4
      %s22 = sphi 0, %s34
      %s23 = sphi 0, %s30
      %s24 = sphi 0, %s22
      %s25 = sphi 0, %s23
      %s26 = sphi 0, %s24
      %s27 = sphi 0, %s25
      %s39 = sphi 0, %s41
      %s42 = sphi 0, %s39
      %s43 = sphi 0, %s42
      %s59 = sphi 0, %s43
      %s63 = sphi 0, %s63
      %s65 = sphi 0, %s63
      %s66 = sphi 0, %s65
      %s80 = sphi 0, %s66
      %s84 = sphi 0, %s84
      %s86 = sphi 0, %s84
      %s87 = sphi 0, %s86
      %s101 = sphi 0, %s87
      %s109 = sphi 0, %s111
      %s112 = sphi 0, %s109
      %s113 = sphi 0, %s112
      %s129 = sphi 0, %s113
      %s137 = sphi 0, %s139
      %s140 = sphi 0, %s137
      %s141 = sphi 0, %s140
      %s157 = sphi 0, %s141
    $region4: #{tpu_custom_call.1} parent=1 // loop_header_branch
      %18 = sbr.rel (%p16) target = $region8
    $region5: #{tpu_custom_call.1} parent=1 // loop_body
      %s20 = ssub.s32 %s15, 1
      %s21 = ssub.s32 %s15, 2
      %s28 = sadd.s32 1, %s23
      %p29 = scmp.ge.s32.totalorder %s28, 1
      %s30 = scalar_select %p29, 0, %s28
      %s31 = sadd.s32 1, %s22
      %s32 = scalar_select %p29, %s31, %s22
      %p33 = scmp.ge.s32.totalorder %s32, 2
      %s34 = scalar_select %p33, 0, %s32
      %s35 = ssub.s32 %s22, %s34
      %s36 = ssub.s32 %s23, %s30
      %s37 = sor.u32 %s35, %s36
      %p38 = scmp.eq.s32.totalorder %s37, 0
      %s40 = sadd.s32 %s39, 1
      %s41 = scalar_select %p38, %s39, %s40
      %p44 = pneg %p38
      %p45 = scmp.eq.s32.totalorder %s15, 1
      %p46 = por %p44, %p45
      %p47 = scmp.ne.s32.totalorder %s39, %s42
      %p48 = scmp.eq.s32.totalorder %s15, 0
      %p49 = por %p47, %p48
      %p50 = scmp.ne.s32.totalorder %s39, %s42
      %p51 = scmp.eq.s32.totalorder %s20, 1
      %p52 = por %p50, %p51
      %p53 = scmp.ne.s32.totalorder %s42, %s43
      %p54 = scmp.eq.s32.totalorder %s20, 0
      %p55 = por %p53, %p54
      %p56 = scmp.ne.s32.totalorder %s42, %s43
      %p57 = scmp.eq.s32.totalorder %s21, 1
      %p58 = por %p56, %p57
      %p60 = scmp.ne.s32.totalorder %s43, %s59
      %p61 = scmp.eq.s32.totalorder %s21, 0
      %p62 = por %p60, %p61
      %s64 = sadd.s32 %s63, 1
      %p67 = scmp.eq.s32.totalorder %s15, 1
      %p68 = scmp.ne.s32.totalorder %s63, %s65
      %p69 = scmp.eq.s32.totalorder %s15, 0
      %p70 = por %p68, %p69
      %p71 = scmp.ne.s32.totalorder %s63, %s65
      %p72 = scmp.eq.s32.totalorder %s20, 1
      %p73 = por %p71, %p72
      %p74 = scmp.ne.s32.totalorder %s65, %s66
      %p75 = scmp.eq.s32.totalorder %s20, 0
      %p76 = por %p74, %p75
      %p77 = scmp.ne.s32.totalorder %s65, %s66
      %p78 = scmp.eq.s32.totalorder %s21, 1
      %p79 = por %p77, %p78
      %p81 = scmp.ne.s32.totalorder %s66, %s80
      %p82 = scmp.eq.s32.totalorder %s21, 0
      %p83 = por %p81, %p82
      %s85 = sadd.s32 %s84, 1
      %p88 = scmp.eq.s32.totalorder %s15, 1
      %p89 = scmp.ne.s32.totalorder %s84, %s86
      %p90 = scmp.eq.s32.totalorder %s15, 0
      %p91 = por %p89, %p90
      %p92 = scmp.ne.s32.totalorder %s84, %s86
      %p93 = scmp.eq.s32.totalorder %s20, 1
      %p94 = por %p92, %p93
      %p95 = scmp.ne.s32.totalorder %s86, %s87
      %p96 = scmp.eq.s32.totalorder %s20, 0
      %p97 = por %p95, %p96
      %p98 = scmp.ne.s32.totalorder %s86, %s87
      %p99 = scmp.eq.s32.totalorder %s21, 1
      %p100 = por %p98, %p99
      %p102 = scmp.ne.s32.totalorder %s87, %s101
      %p103 = scmp.eq.s32.totalorder %s21, 0
      %p104 = por %p102, %p103
      %s105 = ssub.s32 %s22, %s34
      %s106 = ssub.s32 %s23, %s30
      %s107 = sor.u32 %s105, %s106
      %p108 = scmp.eq.s32.totalorder %s107, 0
      %s110 = sadd.s32 %s109, 1
      %s111 = scalar_select %p108, %s109, %s110
      %p114 = pneg %p108
      %p115 = scmp.eq.s32.totalorder %s15, 1
      %p116 = por %p114, %p115
      %p117 = scmp.ne.s32.totalorder %s109, %s112
      %p118 = scmp.eq.s32.totalorder %s15, 0
      %p119 = por %p117, %p118
      %p120 = scmp.ne.s32.totalorder %s109, %s112
      %p121 = scmp.eq.s32.totalorder %s20, 1
      %p122 = por %p120, %p121
      %p123 = scmp.ne.s32.totalorder %s112, %s113
      %p124 = scmp.eq.s32.totalorder %s20, 0
      %p125 = por %p123, %p124
      %p126 = scmp.ne.s32.totalorder %s112, %s113
      %p127 = scmp.eq.s32.totalorder %s21, 1
      %p128 = por %p126, %p127
      %p130 = scmp.ne.s32.totalorder %s113, %s129
      %p131 = scmp.eq.s32.totalorder %s21, 0
      %p132 = por %p130, %p131
      %s133 = ssub.s32 %s22, %s34
      %s134 = ssub.s32 %s23, %s30
      %s135 = sor.u32 %s133, %s134
      %p136 = scmp.eq.s32.totalorder %s135, 0
      %s138 = sadd.s32 %s137, 1
      %s139 = scalar_select %p136, %s137, %s138
      %p142 = pneg %p136
      %p143 = scmp.eq.s32.totalorder %s15, 1
      %p144 = por %p142, %p143
      %p145 = scmp.ne.s32.totalorder %s137, %s140
      %p146 = scmp.eq.s32.totalorder %s15, 0
      %p147 = por %p145, %p146
      %p148 = scmp.ne.s32.totalorder %s137, %s140
      %p149 = scmp.eq.s32.totalorder %s20, 1
      %p150 = por %p148, %p149
      %p151 = scmp.ne.s32.totalorder %s140, %s141
      %p152 = scmp.eq.s32.totalorder %s20, 0
      %p153 = por %p151, %p152
      %p154 = scmp.ne.s32.totalorder %s140, %s141
      %p155 = scmp.eq.s32.totalorder %s21, 1
      %p156 = por %p154, %p155
      %p158 = scmp.ne.s32.totalorder %s141, %s157
      %p159 = scmp.eq.s32.totalorder %s21, 0
      %p160 = por %p158, %p159
      %p161 = scmp.le.s32.totalorder 1, %s15
      %p162 = scmp.lt.s32.totalorder %s15, 3
      %p163 = pnand %p161, %p162
      %p164 = pneg %p163
      // Predicated region
      $region9: #{tpu_custom_call.1} parent=5 // pred_check
        _
      $region10: #{tpu_custom_call.1} parent=5 // pred_check_branch
        %166 = sbr.rel (%p163) target = $region12
      $region11: #{tpu_custom_call.1} parent=5 // pred_region
        %s167 = ssub.s32 %s15, 1
        // Predicated region
        $region13: #{tpu_custom_call.1} parent=11 // pred_check
          %p168 = pneg %p76
        $region14: #{tpu_custom_call.1} parent=11 // pred_check_branch
          %170 = sbr.rel (%p168) target = $region16
        $region15: #{tpu_custom_call.1} parent=11 // pred_region
          %172 = vsyncadd [#allocation5], 0
          %s173 = sshll.u32 %s1, 4
          %s174 = int_to_ptr.hbm [resolvable:$true] %s173
          %s175 = sshll.u32 [#allocation4], 4
          %s176 = int_to_ptr.vmem [resolvable:$true] %s175
          %181 = dma.hbm_to_vmem [thread:$0]  %s174, 1024, %s176, [#allocation5], 128, 128, 8
        $region16: #{tpu_custom_call.1} parent=11 // pred_fallthru
          _
        // Predicated region
        $region17: #{tpu_custom_call.1} parent=11 // pred_check
          %p182 = pneg %p97
        $region18: #{tpu_custom_call.1} parent=11 // pred_check_branch
          %184 = sbr.rel (%p182) target = $region20
        $region19: #{tpu_custom_call.1} parent=11 // pred_region
          _
        $region20: #{tpu_custom_call.1} parent=11 // pred_fallthru
          _
      $region12: #{tpu_custom_call.1} parent=5 // pred_fallthru
        _
      %p185 = scmp.lt.s32.totalorder %s15, 2
      // Predicated region
      $region21: #{tpu_custom_call.1} parent=5 // pred_check
        %p186 = pneg %p185
      $region22: #{tpu_custom_call.1} parent=5 // pred_check_branch
        %188 = sbr.rel (%p186) target = $region24
      $region23: #{tpu_custom_call.1} parent=5 // pred_region
        // Predicated region
        $region25: #{tpu_custom_call.1} parent=23 // pred_check
          %p189 = pneg %p49
        $region26: #{tpu_custom_call.1} parent=23 // pred_check_branch
          %191 = sbr.rel (%p189) target = $region28
        $region27: #{tpu_custom_call.1} parent=23 // pred_region
          %s192 = sand.u32 %s39, 1
          %s193 = scalar_lea.sflag [#allocation3], %s192
          %s194 = sand.u32 %s39, 1
          %s195 = smul.addr %s194, 128
          %s196 = scalar_lea.vmem [#allocation2], %s195
          %s197 = smul.u32 2, %s23
          %199 = vsyncadd %s193, 0
          %s200 = smul.addr %s22, 16
          %s201 = sadd.s32 %s197, %s200
          %s202 = smul.addr %s201, 8
          %s203 = scalar_lea.hbm %s0, %s202
          %s204 = sshll.u32 %s203, 4
          %s205 = int_to_ptr.hbm [resolvable:$true] %s204
          %s206 = sshll.u32 %s196, 4
          %s207 = int_to_ptr.vmem [resolvable:$true] %s206
          %212 = dma.hbm_to_vmem [thread:$0]  %s205, 2048, %s207, %s193, 256, 256, 16
        $region28: #{tpu_custom_call.1} parent=23 // pred_fallthru
          _
      $region24: #{tpu_custom_call.1} parent=5 // pred_fallthru
        _
      %p213 = scmp.le.s32.totalorder 1, %s15
      %p214 = scmp.lt.s32.totalorder %s15, 3
      %p215 = pnand %p213, %p214
      %p216 = pneg %p215
      // Predicated region
      $region29: #{tpu_custom_call.1} parent=5 // pred_check
        _
      $region30: #{tpu_custom_call.1} parent=5 // pred_check_branch
        %218 = sbr.rel (%p215) target = $region32
      $region31: #{tpu_custom_call.1} parent=5 // pred_region
        %s219 = ssub.s32 %s15, 1
        %s220 = sand.u32 %s42, 1
        %s221 = scalar_lea.sflag [#allocation3], %s220
        %s222 = sand.u32 %s42, 1
        %s223 = smul.addr %s222, 128
        %s224 = scalar_lea.vmem [#allocation2], %s223
        // Predicated region
        $region33: #{tpu_custom_call.1} parent=31 // pred_check
          %p225 = pneg %p55
        $region34: #{tpu_custom_call.1} parent=31 // pred_check_branch
          %227 = sbr.rel (%p225) target = $region36
        $region35: #{tpu_custom_call.1} parent=31 // pred_region
          %229 = dma.done %s221, 2048
        $region36: #{tpu_custom_call.1} parent=31 // pred_fallthru
          _
        // Predicated region
        $region37: #{tpu_custom_call.1} parent=31 // pred_check
          %p230 = pneg %p76
        $region38: #{tpu_custom_call.1} parent=31 // pred_check_branch
          %232 = sbr.rel (%p230) target = $region40
        $region39: #{tpu_custom_call.1} parent=31 // pred_region
          %234 = dma.done [#allocation5], 1024
        $region40: #{tpu_custom_call.1} parent=31 // pred_fallthru
          _
        %s235 = sand.u32 %s42, 1
        %s236 = scalar_lea.sflag [#allocation3], %s235
        %s237 = sand.u32 %s42, 1
        %s238 = smul.addr %s237, 128
        %s239 = scalar_lea.vmem [#allocation2], %s238
        %p240 = pneg %p55
        %p241 = pneg %p52
        %p242 = pneg %p76
        %p243 = pneg %p73
        %p244 = pneg %p97
        %p245 = pneg %p94
        %p246 = pneg %p125
        %p247 = pneg %p122
        %s248 = smul.u32 32, %s25
        %p249 = scmp.lt.s32.totalorder %s24, 1
        %s250 = scalar_select %p249, %s24, 1
        %p251 = scmp.lt.s32.totalorder %s248, 31
        %s252 = scalar_select %p251, %s248, 31
        %s253 = smul.addr %s250, 32
        %s254 = sadd.s32 %s252, %s253
        %s255 = smul.addr %s254, 8
        %s256 = scalar_lea.vmem %s3, %s255
        %p257 = pneg %p153
        %p258 = pneg %p150
        %s259 = smul.u32 32, %s25
        %p260 = scmp.lt.s32.totalorder %s24, 1
        %s261 = scalar_select %p260, %s24, 1
        %p262 = scmp.lt.s32.totalorder %s259, 31
        %s263 = scalar_select %p262, %s259, 31
        %s264 = smul.addr %s261, 32
        %s265 = sadd.s32 %s263, %s264
        %s266 = smul.addr %s265, 8
        %s267 = scalar_lea.vmem %s4, %s266
        %s268 = smul.u32 2, %s25
        %s269 = smul.u32 32, %s25
        %p270 = scmp.lt.s32.totalorder %s24, 1
        %s271 = scalar_select %p270, %s24, 1
        %p272 = scmp.lt.s32.totalorder %s269, 31
        %s273 = scalar_select %p272, %s269, 31
        %s274 = smul.addr %s271, 32
        %s275 = sadd.s32 %s273, %s274
        %s276 = smul.addr %s275, 8
        %s277 = scalar_lea.vmem %s3, %s276
        %s278 = smul.u32 32, %s25
        %s279 = smul.u32 32, %s25
        %p280 = scmp.lt.s32.totalorder %s24, 1
        %s281 = scalar_select %p280, %s24, 1
        %p282 = scmp.lt.s32.totalorder %s279, 31
        %s283 = scalar_select %p282, %s279, 31
        %s284 = smul.addr %s281, 32
        %s285 = sadd.s32 %s283, %s284
        %s286 = smul.addr %s285, 8
        %s287 = scalar_lea.vmem %s4, %s286
        %s288 = smul.u32 32, %s25
        %v289 = vld [vmem:[%s224] sm:$0xff]
        %v290 = vld [vmem:[%s224 + $0x8] sm:$0xff]
        %v291 = vld [vmem:[%s224 + $0x10] sm:$0xff]
        %v292 = vld [vmem:[%s224 + $0x18] sm:$0xff]
        %v293 = vld [vmem:[%s224 + $0x20] sm:$0xff]
        %v294 = vld [vmem:[%s224 + $0x28] sm:$0xff]
        %v295 = vld [vmem:[%s224 + $0x30] sm:$0xff]
        %v296 = vld [vmem:[%s224 + $0x38] sm:$0xff]
        %v297 = vld [vmem:[%s224 + $0x40] sm:$0xff]
        %v298 = vld [vmem:[%s224 + $0x48] sm:$0xff]
        %v299 = vld [vmem:[%s224 + $0x50] sm:$0xff]
        %v300 = vld [vmem:[%s224 + $0x58] sm:$0xff]
        %v301 = vld [vmem:[%s224 + $0x60] sm:$0xff]
        %v302 = vld [vmem:[%s224 + $0x68] sm:$0xff]
        %v303 = vld [vmem:[%s224 + $0x70] sm:$0xff]
        %v304 = vld [vmem:[%s224 + $0x78] sm:$0xff]
        %v305 = vld [vmem:[#allocation4] sm:$0xff]
        %v306 = vld [vmem:[#allocation4 + $0x8] sm:$0xff]
        %v307 = vld [vmem:[#allocation4 + $0x10] sm:$0xff]
        %v308 = vld [vmem:[#allocation4 + $0x18] sm:$0xff]
        %v309 = vld [vmem:[#allocation4 + $0x20] sm:$0xff]
        %v310 = vld [vmem:[#allocation4 + $0x28] sm:$0xff]
        %v311 = vld [vmem:[#allocation4 + $0x30] sm:$0xff]
        %v312 = vld [vmem:[#allocation4 + $0x38] sm:$0xff]
        %v313 = vld [vmem:[%s2] sm:$0x1]
        %v315 = vperm.slane %v313, 0
        %317 = vxpose.xlu0.b32.start [1/16] %v289, 128
        %318 = vxpose.xlu0.b32.cont [2/16] %v291, 128
        %319 = vxpose.xlu0.b32.cont [3/16] %v293, 128
        %320 = vxpose.xlu0.b32.cont [4/16] %v295, 128
        %321 = vxpose.xlu0.b32.cont [5/16] %v297, 128
        %322 = vxpose.xlu0.b32.cont [6/16] %v299, 128
        %323 = vxpose.xlu0.b32.cont [7/16] %v301, 128
        %324 = vxpose.xlu0.b32.cont [8/16] %v303, 128
        %325 = vxpose.xlu0.b32.cont [9/16] 0.0, 128
        %326 = vxpose.xlu0.b32.cont [10/16] 0.0, 128
        %327 = vxpose.xlu0.b32.cont [11/16] 0.0, 128
        %328 = vxpose.xlu0.b32.cont [12/16] 0.0, 128
        %329 = vxpose.xlu0.b32.cont [13/16] 0.0, 128
        %330 = vxpose.xlu0.b32.cont [14/16] 0.0, 128
        %331 = vxpose.xlu0.b32.cont [15/16] 0.0, 128
        %332 = vxpose.xlu0.b32.end [16/16] 0.0, 128
        %v333 = vpop.trf.xlu0
        %v334 = vpop.trf.xlu0
        %v335 = vpop.trf.xlu0
        %v336 = vpop.trf.xlu0
        %v337 = vpop.trf.xlu0
        %v338 = vpop.trf.xlu0
        %v339 = vpop.trf.xlu0
        %v340 = vpop.trf.xlu0
        %v341 = vpop.trf.xlu0
        %v342 = vpop.trf.xlu0
        %v343 = vpop.trf.xlu0
        %v344 = vpop.trf.xlu0
        %v345 = vpop.trf.xlu0
        %v346 = vpop.trf.xlu0
        %v347 = vpop.trf.xlu0
        %v348 = vpop.trf.xlu0
        %349 = vxpose.xlu0.b32.start [1/16] %v290, 128
        %350 = vxpose.xlu0.b32.cont [2/16] %v292, 128
        %351 = vxpose.xlu0.b32.cont [3/16] %v294, 128
        %352 = vxpose.xlu0.b32.cont [4/16] %v296, 128
        %353 = vxpose.xlu0.b32.cont [5/16] %v298, 128
        %354 = vxpose.xlu0.b32.cont [6/16] %v300, 128
        %355 = vxpose.xlu0.b32.cont [7/16] %v302, 128
        %356 = vxpose.xlu0.b32.cont [8/16] %v304, 128
        %357 = vxpose.xlu0.b32.cont [9/16] 0.0, 128
        %358 = vxpose.xlu0.b32.cont [10/16] 0.0, 128
        %359 = vxpose.xlu0.b32.cont [11/16] 0.0, 128
        %360 = vxpose.xlu0.b32.cont [12/16] 0.0, 128
        %361 = vxpose.xlu0.b32.cont [13/16] 0.0, 128
        %362 = vxpose.xlu0.b32.cont [14/16] 0.0, 128
        %363 = vxpose.xlu0.b32.cont [15/16] 0.0, 128
        %364 = vxpose.xlu0.b32.end [16/16] 0.0, 128
        %v365 = vpop.trf.xlu0
        %v366 = vpop.trf.xlu0
        %v367 = vpop.trf.xlu0
        %v368 = vpop.trf.xlu0
        %v369 = vpop.trf.xlu0
        %v370 = vpop.trf.xlu0
        %v371 = vpop.trf.xlu0
        %v372 = vpop.trf.xlu0
        %v373 = vpop.trf.xlu0
        %v374 = vpop.trf.xlu0
        %v375 = vpop.trf.xlu0
        %v376 = vpop.trf.xlu0
        %v377 = vpop.trf.xlu0
        %v378 = vpop.trf.xlu0
        %v379 = vpop.trf.xlu0
        %v380 = vpop.trf.xlu0
        %vm381 = vcmask 523264
        %v383 = vsel %vm381, %v333, 0
        %v386 = vsel %vm381, %v334, 0
        %v389 = vsel %vm381, %v335, 0
        %v392 = vsel %vm381, %v336, 0
        %v395 = vsel %vm381, %v337, 0
        %v398 = vsel %vm381, %v338, 0
        %v401 = vsel %vm381, %v339, 0
        %v404 = vsel %vm381, %v340, 0
        %v407 = vsel %vm381, %v341, 0
        %v410 = vsel %vm381, %v342, 0
        %v413 = vsel %vm381, %v343, 0
        %v416 = vsel %vm381, %v344, 0
        %v419 = vsel %vm381, %v345, 0
        %v422 = vsel %vm381, %v346, 0
        %v425 = vsel %vm381, %v347, 0
        %v428 = vsel %vm381, %v348, 0
        %v431 = vsel %vm381, %v365, 0
        %v434 = vsel %vm381, %v366, 0
        %v437 = vsel %vm381, %v367, 0
        %v440 = vsel %vm381, %v368, 0
        %v443 = vsel %vm381, %v369, 0
        %v446 = vsel %vm381, %v370, 0
        %v449 = vsel %vm381, %v371, 0
        %v452 = vsel %vm381, %v372, 0
        %v455 = vsel %vm381, %v373, 0
        %v458 = vsel %vm381, %v374, 0
        %v461 = vsel %vm381, %v375, 0
        %v464 = vsel %vm381, %v376, 0
        %v467 = vsel %vm381, %v377, 0
        %v470 = vsel %vm381, %v378, 0
        %v473 = vsel %vm381, %v379, 0
        %v476 = vsel %vm381, %v380, 0
        %478 = vmatpush.msra.mxu0 0.0
        %479 = vmatpush.msra.mxu0 0.0
        %480 = vmatpush.msra.mxu0 0.0
        %481 = vmatpush.msra.mxu0 0.0
        %482 = vmatpush.msra.mxu0 0.0
        %483 = vmatpush.msra.mxu0 0.0
        %484 = vmatpush.msra.mxu0 0.0
        %485 = vmatpush.msra.mxu0 0.0
        %486 = vmatpush.msra.mxu0 %v312
        %487 = vmatpush.msra.mxu0 %v311
        %488 = vmatpush.msra.mxu0 %v310
        %489 = vmatpush.msra.mxu0 %v309
        %490 = vmatpush.msra.mxu0 %v308
        %491 = vmatpush.msra.mxu0 %v307
        %492 = vmatpush.msra.mxu0 %v306
        %493 = vmatpush.msra.mxu0 %v305
        %494 = vmatmul.f32.gmra.mxu0 %v383
        %v495 = vpop.f32.mrf.mxu0
        %v496 = vadd.f32 %v315, %v495
        %497 = vmatmul.f32.gmra.mxu0 %v386
        %v498 = vpop.f32.mrf.mxu0
        %v499 = vadd.f32 %v315, %v498
        %500 = vmatmul.f32.gmra.mxu0 %v389
        %v501 = vpop.f32.mrf.mxu0
        %v502 = vadd.f32 %v315, %v501
        %503 = vmatmul.f32.gmra.mxu0 %v392
        %v504 = vpop.f32.mrf.mxu0
        %v505 = vadd.f32 %v315, %v504
        %506 = vmatmul.f32.gmra.mxu0 %v395
        %v507 = vpop.f32.mrf.mxu0
        %v508 = vadd.f32 %v315, %v507
        %509 = vmatmul.f32.gmra.mxu0 %v398
        %v510 = vpop.f32.mrf.mxu0
        %v511 = vadd.f32 %v315, %v510
        %512 = vmatmul.f32.gmra.mxu0 %v401
        %v513 = vpop.f32.mrf.mxu0
        %v514 = vadd.f32 %v315, %v513
        %515 = vmatmul.f32.gmra.mxu0 %v404
        %v516 = vpop.f32.mrf.mxu0
        %v517 = vadd.f32 %v315, %v516
        %518 = vmatmul.f32.gmra.mxu0 %v407
        %v519 = vpop.f32.mrf.mxu0
        %v520 = vadd.f32 %v315, %v519
        %521 = vmatmul.f32.gmra.mxu0 %v410
        %v522 = vpop.f32.mrf.mxu0
        %v523 = vadd.f32 %v315, %v522
        %524 = vmatmul.f32.gmra.mxu0 %v413
        %v525 = vpop.f32.mrf.mxu0
        %v526 = vadd.f32 %v315, %v525
        %527 = vmatmul.f32.gmra.mxu0 %v416
        %v528 = vpop.f32.mrf.mxu0
        %v529 = vadd.f32 %v315, %v528
        %530 = vmatmul.f32.gmra.mxu0 %v419
        %v531 = vpop.f32.mrf.mxu0
        %v532 = vadd.f32 %v315, %v531
        %533 = vmatmul.f32.gmra.mxu0 %v422
        %v534 = vpop.f32.mrf.mxu0
        %v535 = vadd.f32 %v315, %v534
        %536 = vmatmul.f32.gmra.mxu0 %v425
        %v537 = vpop.f32.mrf.mxu0
        %v538 = vadd.f32 %v315, %v537
        %539 = vmatmul.f32.gmra.mxu0 %v428
        %v540 = vpop.f32.mrf.mxu0
        %v541 = vadd.f32 %v315, %v540
        %542 = vmatmul.f32.gmra.mxu0 %v431
        %v543 = vpop.f32.mrf.mxu0
        %v544 = vadd.f32 %v315, %v543
        %545 = vmatmul.f32.gmra.mxu0 %v434
        %v546 = vpop.f32.mrf.mxu0
        %v547 = vadd.f32 %v315, %v546
        %548 = vmatmul.f32.gmra.mxu0 %v437
        %v549 = vpop.f32.mrf.mxu0
        %v550 = vadd.f32 %v315, %v549
        %551 = vmatmul.f32.gmra.mxu0 %v440
        %v552 = vpop.f32.mrf.mxu0
        %v553 = vadd.f32 %v315, %v552
        %554 = vmatmul.f32.gmra.mxu0 %v443
        %v555 = vpop.f32.mrf.mxu0
        %v556 = vadd.f32 %v315, %v555
        %557 = vmatmul.f32.gmra.mxu0 %v446
        %v558 = vpop.f32.mrf.mxu0
        %v559 = vadd.f32 %v315, %v558
        %560 = vmatmul.f32.gmra.mxu0 %v449
        %v561 = vpop.f32.mrf.mxu0
        %v562 = vadd.f32 %v315, %v561
        %563 = vmatmul.f32.gmra.mxu0 %v452
        %v564 = vpop.f32.mrf.mxu0
        %v565 = vadd.f32 %v315, %v564
        %566 = vmatmul.f32.gmra.mxu0 %v455
        %v567 = vpop.f32.mrf.mxu0
        %v568 = vadd.f32 %v315, %v567
        %569 = vmatmul.f32.gmra.mxu0 %v458
        %v570 = vpop.f32.mrf.mxu0
        %v571 = vadd.f32 %v315, %v570
        %572 = vmatmul.f32.gmra.mxu0 %v461
        %v573 = vpop.f32.mrf.mxu0
        %v574 = vadd.f32 %v315, %v573
        %575 = vmatmul.f32.gmra.mxu0 %v464
        %v576 = vpop.f32.mrf.mxu0
        %v577 = vadd.f32 %v315, %v576
        %578 = vmatmul.f32.gmra.mxu0 %v467
        %v579 = vpop.f32.mrf.mxu0
        %v580 = vadd.f32 %v315, %v579
        %581 = vmatmul.f32.gmra.mxu0 %v470
        %v582 = vpop.f32.mrf.mxu0
        %v583 = vadd.f32 %v315, %v582
        %584 = vmatmul.f32.gmra.mxu0 %v473
        %v585 = vpop.f32.mrf.mxu0
        %v586 = vadd.f32 %v315, %v585
        %587 = vmatmul.f32.gmra.mxu0 %v476
        %v588 = vpop.f32.mrf.mxu0
        %v589 = vadd.f32 %v315, %v588
        %590 = vdwg.mxu0
        %591 = vst.msk [vmem:[%s277] sm:$0xff] %vm381, %v496
        %592 = vst.msk [vmem:[%s277 + $0x8] sm:$0xff] %vm381, %v499
        %593 = vst.msk [vmem:[%s277 + $0x10] sm:$0xff] %vm381, %v502
        %594 = vst.msk [vmem:[%s277 + $0x18] sm:$0xff] %vm381, %v505
        %595 = vst.msk [vmem:[%s277 + $0x20] sm:$0xff] %vm381, %v508
        %596 = vst.msk [vmem:[%s277 + $0x28] sm:$0xff] %vm381, %v511
        %597 = vst.msk [vmem:[%s277 + $0x30] sm:$0xff] %vm381, %v514
        %598 = vst.msk [vmem:[%s277 + $0x38] sm:$0xff] %vm381, %v517
        %599 = vst.msk [vmem:[%s277 + $0x40] sm:$0xff] %vm381, %v520
        %600 = vst.msk [vmem:[%s277 + $0x48] sm:$0xff] %vm381, %v523
        %601 = vst.msk [vmem:[%s277 + $0x50] sm:$0xff] %vm381, %v526
        %602 = vst.msk [vmem:[%s277 + $0x58] sm:$0xff] %vm381, %v529
        %603 = vst.msk [vmem:[%s277 + $0x60] sm:$0xff] %vm381, %v532
        %604 = vst.msk [vmem:[%s277 + $0x68] sm:$0xff] %vm381, %v535
        %605 = vst.msk [vmem:[%s277 + $0x70] sm:$0xff] %vm381, %v538
        %606 = vst.msk [vmem:[%s277 + $0x78] sm:$0xff] %vm381, %v541
        %607 = vst.msk [vmem:[%s277 + $0x80] sm:$0xff] %vm381, %v544
        %608 = vst.msk [vmem:[%s277 + $0x88] sm:$0xff] %vm381, %v547
        %609 = vst.msk [vmem:[%s277 + $0x90] sm:$0xff] %vm381, %v550
        %610 = vst.msk [vmem:[%s277 + $0x98] sm:$0xff] %vm381, %v553
        %611 = vst.msk [vmem:[%s277 + $0xa0] sm:$0xff] %vm381, %v556
        %612 = vst.msk [vmem:[%s277 + $0xa8] sm:$0xff] %vm381, %v559
        %613 = vst.msk [vmem:[%s277 + $0xb0] sm:$0xff] %vm381, %v562
        %614 = vst.msk [vmem:[%s277 + $0xb8] sm:$0xff] %vm381, %v565
        %615 = vst.msk [vmem:[%s277 + $0xc0] sm:$0xff] %vm381, %v568
        %616 = vst.msk [vmem:[%s277 + $0xc8] sm:$0xff] %vm381, %v571
        %617 = vst.msk [vmem:[%s277 + $0xd0] sm:$0xff] %vm381, %v574
        %618 = vst.msk [vmem:[%s277 + $0xd8] sm:$0xff] %vm381, %v577
        %619 = vst.msk [vmem:[%s277 + $0xe0] sm:$0xff] %vm381, %v580
        %620 = vst.msk [vmem:[%s277 + $0xe8] sm:$0xff] %vm381, %v583
        %621 = vst.msk [vmem:[%s277 + $0xf0] sm:$0xff] %vm381, %v586
        %622 = vst.msk [vmem:[%s277 + $0xf8] sm:$0xff] %vm381, %v589
        %655 = vrot.lane.b32.xlu0 %v496, 64
        %v656 = vpop.permute.xlu0 %655
        %657 = vrot.lane.b32.xlu0 %v499, 64
        %v658 = vpop.permute.xlu0 %657
        %659 = vrot.lane.b32.xlu0 %v502, 64
        %v660 = vpop.permute.xlu0 %659
        %661 = vrot.lane.b32.xlu0 %v505, 64
        %v662 = vpop.permute.xlu0 %661
        %663 = vrot.lane.b32.xlu0 %v508, 64
        %v664 = vpop.permute.xlu0 %663
        %665 = vrot.lane.b32.xlu0 %v511, 64
        %v666 = vpop.permute.xlu0 %665
        %667 = vrot.lane.b32.xlu0 %v514, 64
        %v668 = vpop.permute.xlu0 %667
        %669 = vrot.lane.b32.xlu0 %v517, 64
        %v670 = vpop.permute.xlu0 %669
        %671 = vrot.lane.b32.xlu0 %v520, 64
        %v672 = vpop.permute.xlu0 %671
        %673 = vrot.lane.b32.xlu0 %v523, 64
        %v674 = vpop.permute.xlu0 %673
        %675 = vrot.lane.b32.xlu0 %v526, 64
        %v676 = vpop.permute.xlu0 %675
        %677 = vrot.lane.b32.xlu0 %v529, 64
        %v678 = vpop.permute.xlu0 %677
        %679 = vrot.lane.b32.xlu0 %v532, 64
        %v680 = vpop.permute.xlu0 %679
        %681 = vrot.lane.b32.xlu0 %v535, 64
        %v682 = vpop.permute.xlu0 %681
        %683 = vrot.lane.b32.xlu0 %v538, 64
        %v684 = vpop.permute.xlu0 %683
        %685 = vrot.lane.b32.xlu0 %v541, 64
        %v686 = vpop.permute.xlu0 %685
        %687 = vrot.lane.b32.xlu0 %v544, 64
        %v688 = vpop.permute.xlu0 %687
        %689 = vrot.lane.b32.xlu0 %v547, 64
        %v690 = vpop.permute.xlu0 %689
        %691 = vrot.lane.b32.xlu0 %v550, 64
        %v692 = vpop.permute.xlu0 %691
        %693 = vrot.lane.b32.xlu0 %v553, 64
        %v694 = vpop.permute.xlu0 %693
        %695 = vrot.lane.b32.xlu0 %v556, 64
        %v696 = vpop.permute.xlu0 %695
        %697 = vrot.lane.b32.xlu0 %v559, 64
        %v698 = vpop.permute.xlu0 %697
        %699 = vrot.lane.b32.xlu0 %v562, 64
        %v700 = vpop.permute.xlu0 %699
        %701 = vrot.lane.b32.xlu0 %v565, 64
        %v702 = vpop.permute.xlu0 %701
        %703 = vrot.lane.b32.xlu0 %v568, 64
        %v704 = vpop.permute.xlu0 %703
        %705 = vrot.lane.b32.xlu0 %v571, 64
        %v706 = vpop.permute.xlu0 %705
        %707 = vrot.lane.b32.xlu0 %v574, 64
        %v708 = vpop.permute.xlu0 %707
        %709 = vrot.lane.b32.xlu0 %v577, 64
        %v710 = vpop.permute.xlu0 %709
        %711 = vrot.lane.b32.xlu0 %v580, 64
        %v712 = vpop.permute.xlu0 %711
        %713 = vrot.lane.b32.xlu0 %v583, 64
        %v714 = vpop.permute.xlu0 %713
        %715 = vrot.lane.b32.xlu0 %v586, 64
        %v716 = vpop.permute.xlu0 %715
        %717 = vrot.lane.b32.xlu0 %v589, 64
        %v718 = vpop.permute.xlu0 %717
        %751 = vst.msk [vmem:[%s287] sm:$0xff] %vm381, %v656
        %752 = vst.msk [vmem:[%s287 + $0x8] sm:$0xff] %vm381, %v658
        %753 = vst.msk [vmem:[%s287 + $0x10] sm:$0xff] %vm381, %v660
        %754 = vst.msk [vmem:[%s287 + $0x18] sm:$0xff] %vm381, %v662
        %755 = vst.msk [vmem:[%s287 + $0x20] sm:$0xff] %vm381, %v664
        %756 = vst.msk [vmem:[%s287 + $0x28] sm:$0xff] %vm381, %v666
        %757 = vst.msk [vmem:[%s287 + $0x30] sm:$0xff] %vm381, %v668
        %758 = vst.msk [vmem:[%s287 + $0x38] sm:$0xff] %vm381, %v670
        %759 = vst.msk [vmem:[%s287 + $0x40] sm:$0xff] %vm381, %v672
        %760 = vst.msk [vmem:[%s287 + $0x48] sm:$0xff] %vm381, %v674
        %761 = vst.msk [vmem:[%s287 + $0x50] sm:$0xff] %vm381, %v676
        %762 = vst.msk [vmem:[%s287 + $0x58] sm:$0xff] %vm381, %v678
        %763 = vst.msk [vmem:[%s287 + $0x60] sm:$0xff] %vm381, %v680
        %764 = vst.msk [vmem:[%s287 + $0x68] sm:$0xff] %vm381, %v682
        %765 = vst.msk [vmem:[%s287 + $0x70] sm:$0xff] %vm381, %v684
        %766 = vst.msk [vmem:[%s287 + $0x78] sm:$0xff] %vm381, %v686
        %767 = vst.msk [vmem:[%s287 + $0x80] sm:$0xff] %vm381, %v688
        %768 = vst.msk [vmem:[%s287 + $0x88] sm:$0xff] %vm381, %v690
        %769 = vst.msk [vmem:[%s287 + $0x90] sm:$0xff] %vm381, %v692
        %770 = vst.msk [vmem:[%s287 + $0x98] sm:$0xff] %vm381, %v694
        %771 = vst.msk [vmem:[%s287 + $0xa0] sm:$0xff] %vm381, %v696
        %772 = vst.msk [vmem:[%s287 + $0xa8] sm:$0xff] %vm381, %v698
        %773 = vst.msk [vmem:[%s287 + $0xb0] sm:$0xff] %vm381, %v700
        %774 = vst.msk [vmem:[%s287 + $0xb8] sm:$0xff] %vm381, %v702
        %775 = vst.msk [vmem:[%s287 + $0xc0] sm:$0xff] %vm381, %v704
        %776 = vst.msk [vmem:[%s287 + $0xc8] sm:$0xff] %vm381, %v706
        %777 = vst.msk [vmem:[%s287 + $0xd0] sm:$0xff] %vm381, %v708
        %778 = vst.msk [vmem:[%s287 + $0xd8] sm:$0xff] %vm381, %v710
        %779 = vst.msk [vmem:[%s287 + $0xe0] sm:$0xff] %vm381, %v712
        %780 = vst.msk [vmem:[%s287 + $0xe8] sm:$0xff] %vm381, %v714
        %781 = vst.msk [vmem:[%s287 + $0xf0] sm:$0xff] %vm381, %v716
        %782 = vst.msk [vmem:[%s287 + $0xf8] sm:$0xff] %vm381, %v718
        %s783 = smul.u32 32, %s25
        %p784 = scmp.lt.s32.totalorder %s24, 1
        %s785 = scalar_select %p784, %s24, 1
        %p786 = scmp.lt.s32.totalorder %s783, 31
        %s787 = scalar_select %p786, %s783, 31
        %s788 = smul.addr %s785, 32
        %s789 = sadd.s32 %s787, %s788
        %s790 = smul.addr %s789, 8
        %s791 = scalar_lea.vmem %s3, %s790
        %s792 = smul.u32 32, %s25
        %p793 = scmp.lt.s32.totalorder %s24, 1
        %s794 = scalar_select %p793, %s24, 1
        %p795 = scmp.lt.s32.totalorder %s792, 31
        %s796 = scalar_select %p795, %s792, 31
        %s797 = smul.addr %s794, 32
        %s798 = sadd.s32 %s796, %s797
        %s799 = smul.addr %s798, 8
        %s800 = scalar_lea.vmem %s4, %s799
        // Predicated region
        $region41: #{tpu_custom_call.1} parent=31 // pred_check
          %p801 = pneg %p122
        $region42: #{tpu_custom_call.1} parent=31 // pred_check_branch
          %803 = sbr.rel (%p801) target = $region44
        $region43: #{tpu_custom_call.1} parent=31 // pred_region
          %s804 = smul.u32 32, %s25
        $region44: #{tpu_custom_call.1} parent=31 // pred_fallthru
          _
        // Predicated region
        $region45: #{tpu_custom_call.1} parent=31 // pred_check
          %p805 = pneg %p150
        $region46: #{tpu_custom_call.1} parent=31 // pred_check_branch
          %807 = sbr.rel (%p805) target = $region48
        $region47: #{tpu_custom_call.1} parent=31 // pred_region
          %s808 = smul.u32 32, %s25
        $region48: #{tpu_custom_call.1} parent=31 // pred_fallthru
          _
      $region32: #{tpu_custom_call.1} parent=5 // pred_fallthru
        _
      %p809 = scmp.le.s32.totalorder 2, %s15
      // Predicated region
      $region49: #{tpu_custom_call.1} parent=5 // pred_check
        %p810 = pneg %p809
      $region50: #{tpu_custom_call.1} parent=5 // pred_check_branch
        %812 = sbr.rel (%p810) target = $region52
      $region51: #{tpu_custom_call.1} parent=5 // pred_region
        %s813 = ssub.s32 %s15, 2
        // Predicated region
        $region53: #{tpu_custom_call.1} parent=51 // pred_check
          %p814 = pneg %p128
        $region54: #{tpu_custom_call.1} parent=51 // pred_check_branch
          %816 = sbr.rel (%p814) target = $region56
        $region55: #{tpu_custom_call.1} parent=51 // pred_region
          %s817 = smul.u32 32, %s27
          %p818 = scmp.lt.s32.totalorder %s26, 1
          %s819 = scalar_select %p818, %s26, 1
          %p820 = scmp.lt.s32.totalorder %s817, 31
          %s821 = scalar_select %p820, %s817, 31
          %s822 = smul.addr %s819, 32
          %s823 = sadd.s32 %s821, %s822
          %s824 = smul.addr %s823, 8
          %s825 = scalar_lea.vmem %s3, %s824
        $region56: #{tpu_custom_call.1} parent=51 // pred_fallthru
          _
        // Predicated region
        $region57: #{tpu_custom_call.1} parent=51 // pred_check
          %p826 = pneg %p156
        $region58: #{tpu_custom_call.1} parent=51 // pred_check_branch
          %828 = sbr.rel (%p826) target = $region60
        $region59: #{tpu_custom_call.1} parent=51 // pred_region
          %s829 = smul.u32 32, %s27
          %p830 = scmp.lt.s32.totalorder %s26, 1
          %s831 = scalar_select %p830, %s26, 1
          %p832 = scmp.lt.s32.totalorder %s829, 31
          %s833 = scalar_select %p832, %s829, 31
          %s834 = smul.addr %s831, 32
          %s835 = sadd.s32 %s833, %s834
          %s836 = smul.addr %s835, 8
          %s837 = scalar_lea.vmem %s4, %s836
        $region60: #{tpu_custom_call.1} parent=51 // pred_fallthru
          _
      $region52: #{tpu_custom_call.1} parent=5 // pred_fallthru
        _
    $region6: #{tpu_custom_call.1} parent=1 // loop_footer
      %s19 = sadd.s32 1, %s15
    $region7: #{tpu_custom_call.1} parent=1 // loop_footer_branch
      %14 = sbr.rel target = $region3
    $region8: #{tpu_custom_call.1} parent=1 // loop_exit
      _
    %838 = vsyncpa [#allocation3], 1
    %s839 = scalar_lea.sflag [#allocation3], 1
    %840 = vsyncpa %s839, 1
    %841 = vsyncpa [#allocation5], 1

</llo_original>
